<compile_context>
chip_gen: v7x
topology: tpu7x:2x2x1
jax: 0.10.0
libtpu: 0.0.40
codegen_flags: <defaults>
</compile_context>

<pallas_src>
import jax
import jax.numpy as jnp
from jax.experimental import pallas as pl
from jax.experimental.pallas import tpu as pltpu


def _round_up(x, m):
    return ((x + m - 1) // m) * m


# ---------------------------------------------------------------------------
# Primary kernel: XLU gather against a single-vreg resident table.
# ---------------------------------------------------------------------------
def _gather_take_kernel(ids_ref, table_ref, out_ref):
    """ids_ref: (1, TILE) i32 | table_ref: (8, 128) f32 resident | out_ref: (TILE, P) f32."""
    table = table_ref[...]                       # (8, 128): pos on sublanes, totems on lanes
    tile = ids_ref.shape[1]
    pos_dim = out_ref.shape[1]
    for c in range(tile // 128):                 # static unroll: one vreg gather per 128-id chunk
        ids_c = ids_ref[:, pl.ds(c * 128, 128)]                  # (1, 128) i32
        idx = jnp.broadcast_to(ids_c, (8, 128))                  # same shape as the table vreg
        g = jnp.take_along_axis(table, idx, axis=1)              # g[p, j] = table[p, ids[j]]  (XLU)
        # Final (ids, pos_dim) layout straight from the kernel -- no wrapper transpose.
        out_ref[pl.ds(c * 128, 128), :] = jnp.transpose(g)[:, :pos_dim]


def _pallas_gather_take(table_vreg, ids_padded, tile, pos_dim):
    """table_vreg: (8, 128) f32; ids_padded: (1, n_pad) i32; returns (n_pad, pos_dim) f32."""
    n_pad = ids_padded.shape[1]
    return pl.pallas_call(
        _gather_take_kernel,
        out_shape=jax.ShapeDtypeStruct((n_pad, pos_dim), jnp.float32),
        grid=(n_pad // tile,),
        in_specs=[
            # ids: one lane-dense tile per grid step (pipelined / double-buffered).
            pl.BlockSpec((1, tile), lambda i: (0, i)),
            # table: whole array resident in VMEM for the kernel lifetime, single copy
            # (no double-buffering of a block that is never refetched).
            pl.BlockSpec(memory_space=pltpu.MemorySpace.VMEM),
        ],
        out_specs=pl.BlockSpec((tile, pos_dim), lambda i: (i, 0)),
        compiler_params=pltpu.CompilerParams(
            dimension_semantics=("parallel",),        # id tiles independent -> split across v7x TCs
            vmem_limit_bytes=32 * 1024 * 1024),
    )(ids_padded, table_vreg)


# ---------------------------------------------------------------------------
# Fallback kernel: one-hot MXU gather (large tables / gather lowering unsupported).
# ---------------------------------------------------------------------------
def _gather_onehot_kernel(ids_ref, table_t_ref, out_ref):
    """ids_ref: (1, TILE) i32 | table_t_ref: (P_pad, T_pad) f32 | out_ref: (TILE, P) f32."""
    t_pad = table_t_ref.shape[1]
    tile = ids_ref.shape[1]
    # one_hot[t, j] = (ids[j] == t); lane-dense, built on the VPU.
    totem_iota = jax.lax.broadcasted_iota(jnp.int32, (t_pad, tile), 0)
    one_hot = jnp.where(totem_iota == ids_ref[...], 1.0, 0.0)
    # (P_pad, T_pad) @ (T_pad, TILE) -> (P_pad, TILE).  HIGHEST keeps the f32 table
    # exact against the 0/1 weights; the MXU has large slack in this mem-bound op.
    slab = jnp.dot(table_t_ref[...], one_hot,
                   preferred_element_type=jnp.float32,
                   precision=jax.lax.Precision.HIGHEST)
    # Emit directly in the final (ids, pos_dim) layout (XLU transpose, free slot).
    out_ref[...] = jnp.transpose(slab)[:, :out_ref.shape[1]]


def _pallas_gather_onehot(table_t_pad, ids_padded, tile, pos_dim):
    p_pad, t_pad = table_t_pad.shape
    n_pad = ids_padded.shape[1]
    return pl.pallas_call(
        _gather_onehot_kernel,
        out_shape=jax.ShapeDtypeStruct((n_pad, pos_dim), jnp.float32),
        grid=(n_pad // tile,),
        in_specs=[
            pl.BlockSpec((1, tile), lambda i: (0, i)),
            # Full-extent block, constant index map: DMA'd once, stays resident.
            pl.BlockSpec((p_pad, t_pad), lambda i: (0, 0)),
        ],
        out_specs=pl.BlockSpec((tile, pos_dim), lambda i: (i, 0)),
        compiler_params=pltpu.CompilerParams(
            dimension_semantics=("parallel",),
            vmem_limit_bytes=32 * 1024 * 1024),
    )(ids_padded, table_t_pad)


# ---------------------------------------------------------------------------
# One-time capability probe: in-kernel dynamic (lane) gather support varies across
# jax/libtpu versions; if it is unavailable we fall back to the one-hot MXU kernel.
# ---------------------------------------------------------------------------
_TAKE_KERNEL_OK = None


def _take_kernel_supported():
    global _TAKE_KERNEL_OK
    if _TAKE_KERNEL_OK is None:
        try:
            table = jnp.zeros((8, 128), jnp.float32).at[:3, :].set(
                jnp.arange(3 * 128, dtype=jnp.float32).reshape(3, 128))
            ids = jnp.arange(127, -1, -1, dtype=jnp.int32).reshape(1, 128)
            got = _pallas_gather_take(table, ids, tile=128, pos_dim=3)
            want = jnp.transpose(table[:3, :])[::-1, :]
            _TAKE_KERNEL_OK = bool(jnp.allclose(got, want))
        except Exception:
            _TAKE_KERNEL_OK = False
    return _TAKE_KERNEL_OK


# ---------------------------------------------------------------------------
# Tiling: lane-dense tiles, ~8 (even) grid steps, VMEM-budget capped.
# ---------------------------------------------------------------------------
def _choose_tiling(n_ids, num_totems, target_steps=8, max_tile=2048):
    n128 = _round_up(max(n_ids, 1), 128)
    # Keep per-step live data well under the v7x scoped VMEM budget, including the
    # one-hot fallback's (T, TILE) iota/one-hot intermediates.
    per_id_bytes = 64 + 8 * _round_up(num_totems, 8)
    budget_tile = max(128, (8 * 1024 * 1024 // per_id_bytes) // 128 * 128)
    tile = max(128, (n128 // target_steps) // 128 * 128)
    tile = min(tile, budget_tile, max_tile)
    n_pad = _round_up(n128, tile)
    if (n_pad // tile) % 2:               # even tile count so both v7x TCs get equal work
        n_pad += tile
    return tile, n_pad


def learn_totem_pos_forward(totem_id, initial_totem_pos, totem_pos_residual,
                            *, combined_table=None, min_pallas_ids=1024,
                            force_pallas=False, _force_onehot=False):
    """Pallas equivalent of LearnTotemPos.forward.

    Accepts a scalar totem_id (returns (pos_dim,)) or a 1-D batch of ids
    (returns (batch, pos_dim)).  Scalar / small batches take a plain-XLA fast
    path; large batches (or force_pallas=True) use the tiled Pallas gather.
    For repeated calls with a large table, pass a precomputed
    `combined_table = initial_totem_pos + totem_pos_residual` to skip the
    per-call add+transpose passes over the table.
    """
    totem_id = jnp.asarray(totem_id, dtype=jnp.int32)
    scalar_input = (totem_id.ndim == 0)
    ids = jnp.atleast_1d(totem_id)
    n_ids = ids.shape[0]

    if combined_table is None:
        combined_table = (initial_totem_pos.astype(jnp.float32)
                          + totem_pos_residual.astype(jnp.float32))      # (T, P)
    table = combined_table
    num_totems, pos_dim = table.shape

    # Clamp ids so the XLA fast path and the Pallas kernels agree on out-of-range ids.
    # TODO(synk): PyTorch indexing raises on out-of-range ids; here they are clamped.
    ids = jnp.clip(ids, 0, num_totems - 1)

    # Fast path: a Pallas launch is pure overhead for scalar / tiny batches.
    if not force_pallas and (scalar_input or n_ids < min_pallas_ids):
        out = table[ids]
        return out[0] if scalar_input else out

    tile, n_pad = _choose_tiling(n_ids, num_totems)
    # Pad with id 0 (valid after clamp); padded rows are sliced off below.
    ids_padded = jnp.pad(ids, (0, n_pad - n_ids)).reshape(1, n_pad)

    if (not _force_onehot) and num_totems <= 128 and pos_dim <= 8 and _take_kernel_supported():
        # Primary: XLU-gather kernel against the single-vreg resident table.
        table_vreg = jnp.zeros((8, 128), jnp.float32)
        table_vreg = table_vreg.at[:pos_dim, :num_totems].set(table.T)
        out = _pallas_gather_take(table_vreg, ids_padded, tile, pos_dim)
    else:
        # Fallback: one-hot MXU gather.
        # TODO(synk): for very large num_totems, add an "arbitrary" totem-chunk grid
        # axis with an f32 accumulator instead of a fully resident table.
        p_pad = _round_up(pos_dim, 8)
        t_pad = _round_up(num_totems, 8)
        table_t_pad = jnp.zeros((p_pad, t_pad), jnp.float32)
        table_t_pad = table_t_pad.at[:pos_dim, :num_totems].set(table.T)
        out = _pallas_gather_onehot(table_t_pad, ids_padded, tile, pos_dim)

    out = out[:n_ids]          # contiguous row slice only; no wrapper transpose pass
    return out[0] if scalar_input else out


if __name__ == "__main__":
    # Deterministic synthetic parameters (module __init__ takes two
    # (num_totems, 3) float arrays; no checkpoint loading).
    num_totems, pos_dim = 8, 3
    key = jax.random.PRNGKey(0)
    k_init, k_res, k_ids = jax.random.split(key, 3)
    initial_totem_pos = jax.random.normal(k_init, (num_totems, pos_dim), jnp.float32)
    totem_pos_residual = 0.01 * jax.random.normal(k_res, (num_totems, pos_dim), jnp.float32)

    # Scalar totem_id (the typical PyTorch call) -> small-input fast path.
    out_scalar = learn_totem_pos_forward(3, initial_totem_pos, totem_pos_residual)
    out_scalar = jax.block_until_ready(out_scalar)

    # Batched ids through the Pallas gather kernel (forced for this small demo;
    # 300 ids exercises the id padding + multi-step, even-count grid path).
    ids = jax.random.randint(k_ids, (300,), 0, num_totems, dtype=jnp.int32)
    out_batch = learn_totem_pos_forward(ids, initial_totem_pos, totem_pos_residual,
                                        force_pallas=True)
    out_batch = jax.block_until_ready(out_batch)

    # Also exercise the one-hot fallback kernel so both code paths are validated.
    out_onehot = learn_totem_pos_forward(ids, initial_totem_pos, totem_pos_residual,
                                         force_pallas=True, _force_onehot=True)
    out_onehot = jax.block_until_ready(out_onehot)

    # Reference check against plain JAX gather + add.
    ref_scalar = initial_totem_pos[3] + totem_pos_residual[3]
    ref_batch = initial_totem_pos[ids] + totem_pos_residual[ids]
    assert out_scalar.shape == (pos_dim,)
    assert out_batch.shape == (ids.shape[0], pos_dim)
    assert out_onehot.shape == (ids.shape[0], pos_dim)
    assert jnp.allclose(out_scalar, ref_scalar, atol=1e-6)
    assert jnp.allclose(out_batch, ref_batch, atol=1e-5)
    assert jnp.allclose(out_onehot, ref_batch, atol=1e-5)

    print("KERNEL_OK")
</pallas_src>

<mosaic_0001>
module attributes {stable_mosaic.version = 11 : i64} {
  func.func @_gather_take_kernel(%arg0: i32, %arg1: memref<1x128xi32, #tpu.memory_space<vmem>>, %arg2: memref<8x128xf32, #tpu.memory_space<vmem>>, %arg3: memref<128x3xf32, #tpu.memory_space<vmem>>) attributes {dimension_semantics = [#tpu.dimension_semantics<parallel>], iteration_bounds = array<i64: 1>, scalar_prefetch = 0 : i64, scratch_operands = 0 : i64, tpu.core_type = #tpu.core_type<tc>, window_params = [{transform_indices = @transform_0, window_bounds = array<i64: 1, 128>}, {pipeline_mode = #tpu.pipeline_mode<synchronous>, transform_indices = @transform_1, window_bounds = array<i64: 8, 128>}, {transform_indices = @transform_2, window_bounds = array<i64: 128, 3>}]} {
    %c0 = arith.constant 0 : index
    %c0_0 = arith.constant 0 : index
    %0 = vector.load %arg2[%c0, %c0_0] : memref<8x128xf32, #tpu.memory_space<vmem>>, vector<8x128xf32>
    %c0_1 = arith.constant 0 : index
    %c0_2 = arith.constant 0 : index
    %1 = vector.load %arg1[%c0_1, %c0_2] : memref<1x128xi32, #tpu.memory_space<vmem>>, vector<1x128xi32>
    %2 = vector.shape_cast %1 : vector<1x128xi32> to vector<1x128xi32>
    %3 = vector.broadcast %2 : vector<1x128xi32> to vector<8x128xi32>
    %c0_i32 = arith.constant 0 : i32
    %4 = vector.broadcast %c0_i32 : i32 to vector<8x128xi32>
    %5 = arith.cmpi slt, %3, %4 : vector<8x128xi32>
    %c128_i32 = arith.constant 128 : i32
    %6 = vector.broadcast %c128_i32 : i32 to vector<8x128xi32>
    %7 = arith.addi %3, %6 : vector<8x128xi32>
    %8 = arith.select %5, %7, %3 : vector<8x128xi1>, vector<8x128xi32>
    %9 = vector.shape_cast %8 : vector<8x128xi32> to vector<8x128x1xi32>
    %10 = vector.shape_cast %9 : vector<8x128x1xi32> to vector<8x128xi32>
    %11 = tpu.dynamic_gather %0[%10] in [1] : vector<8x128xf32>, vector<8x128xi32> -> vector<8x128xf32>
    %12 = tpu.transpose %11, [1, 0] : vector<8x128xf32> -> vector<128x8xf32>
    %13 = vector.extract_strided_slice %12 {offsets = [0, 0], sizes = [128, 3], strides = [1, 1]} : vector<128x8xf32> to vector<128x3xf32>
    %c0_3 = arith.constant 0 : index
    %c0_4 = arith.constant 0 : index
    %14 = vector.load %arg3[%c0_3, %c0_4] : memref<128x3xf32, #tpu.memory_space<vmem>>, vector<128x3xf32>
    tpu.vector_store %arg3[%c0_3, %c0_4], %13 {strides = array<i32>} : memref<128x3xf32, #tpu.memory_space<vmem>>, vector<128x3xf32>,
    return
  }
  func.func @transform_0(%arg0: i32) -> (i32, i32) {
    %c0_i32 = arith.constant 0 : i32
    %c0_i32_0 = arith.constant 0 : i32
    return %c0_i32, %arg0 : i32, i32
  }
  func.func @transform_1(%arg0: i32) -> (i32, i32) {
    %c0_i32 = arith.constant 0 : i32
    %c0_i32_0 = arith.constant 0 : i32
    %c0_i32_1 = arith.constant 0 : i32
    return %c0_i32, %c0_i32_0 : i32, i32
  }
  func.func @transform_2(%arg0: i32) -> (i32, i32) {
    %c0_i32 = arith.constant 0 : i32
    %c0_i32_0 = arith.constant 0 : i32
    return %arg0, %c0_i32 : i32, i32
  }
}

module attributes {stable_mosaic.version = 11 : i64} {
  func.func @_gather_onehot_kernel(%arg0: i32, %arg1: memref<1x128xi32, #tpu.memory_space<vmem>>, %arg2: memref<8x8xf32, #tpu.memory_space<vmem>>, %arg3: memref<128x3xf32, #tpu.memory_space<vmem>>) attributes {dimension_semantics = [#tpu.dimension_semantics<parallel>], iteration_bounds = array<i64: 4>, scalar_prefetch = 0 : i64, scratch_operands = 0 : i64, tpu.core_type = #tpu.core_type<tc>, window_params = [{transform_indices = @transform_0, window_bounds = array<i64: 1, 128>}, {pipeline_mode = #tpu.pipeline_mode<synchronous>, transform_indices = @transform_1, window_bounds = array<i64: 8, 8>}, {transform_indices = @transform_2, window_bounds = array<i64: 128, 3>}]} {
    %0 = tpu.iota {dimensions = array<i32: 0>} : vector<8x128xi32>
    %c0 = arith.constant 0 : index
    %c0_0 = arith.constant 0 : index
    %1 = vector.load %arg1[%c0, %c0_0] : memref<1x128xi32, #tpu.memory_space<vmem>>, vector<1x128xi32>
    %2 = vector.broadcast %1 : vector<1x128xi32> to vector<8x128xi32>
    %3 = arith.cmpi eq, %0, %2 : vector<8x128xi32>
    %cst = arith.constant 1.000000e+00 : f32
    %cst_1 = arith.constant 0.000000e+00 : f32
    %4 = vector.broadcast %cst : f32 to vector<8x128xf32>
    %5 = vector.broadcast %cst_1 : f32 to vector<8x128xf32>
    %6 = arith.select %3, %4, %5 : vector<8x128xi1>, vector<8x128xf32>
    %c0_2 = arith.constant 0 : index
    %c0_3 = arith.constant 0 : index
    %7 = vector.load %arg2[%c0_2, %c0_3] : memref<8x8xf32, #tpu.memory_space<vmem>>, vector<8x8xf32>
    %cst_4 = arith.constant dense<0.000000e+00> : vector<8x128xf32>
    %8 = tpu.matmul %7, %6, %cst_4 {dimension_numbers = #tpu.dot_dimension_numbers<[1], [0], [0], [1], [0, 0, 1, 1], [], []>, precision = #tpu.contract_precision<fp32>} : vector<8x8xf32>, vector<8x128xf32>, vector<8x128xf32> -> vector<8x128xf32>
    %9 = tpu.transpose %8, [1, 0] : vector<8x128xf32> -> vector<128x8xf32>
    %10 = vector.extract_strided_slice %9 {offsets = [0, 0], sizes = [128, 3], strides = [1, 1]} : vector<128x8xf32> to vector<128x3xf32>
    %c0_5 = arith.constant 0 : index
    %c0_6 = arith.constant 0 : index
    %11 = vector.load %arg3[%c0_5, %c0_6] : memref<128x3xf32, #tpu.memory_space<vmem>>, vector<128x3xf32>
    tpu.vector_store %arg3[%c0_5, %c0_6], %10 {strides = array<i32>} : memref<128x3xf32, #tpu.memory_space<vmem>>, vector<128x3xf32>,
    return
  }
  func.func @transform_0(%arg0: i32) -> (i32, i32) {
    %c0_i32 = arith.constant 0 : i32
    %c0_i32_0 = arith.constant 0 : i32
    return %c0_i32, %arg0 : i32, i32
  }
  func.func @transform_1(%arg0: i32) -> (i32, i32) {
    %c0_i32 = arith.constant 0 : i32
    %c0_i32_0 = arith.constant 0 : i32
    %c0_i32_1 = arith.constant 0 : i32
    return %c0_i32, %c0_i32_0 : i32, i32
  }
  func.func @transform_2(%arg0: i32) -> (i32, i32) {
    %c0_i32 = arith.constant 0 : i32
    %c0_i32_0 = arith.constant 0 : i32
    return %arg0, %c0_i32 : i32, i32
  }
}

</mosaic_0001>

<llo_original>
// kernel: tpu_custom_call.1
$region0: #{tpu_custom_call.1}
  #allocation0 [shape = 'u32[]', space=smem, size = 0x4, offset = 0x4, fixed_abs, tag = 'smem constant byte address 0x4 - core index']
  #allocation1 [shape = 'u32[144,128]{1,0:T(1,128)}', space=vmem, size = 0x12000, scoped, tag = 'internal scratch']
  %s0 = inlined_call_operand.hbm [shape: s32[1,128], index: 0, kind: input, shape index: {}]
  %s1 = inlined_call_operand.hbm [shape: f32[8,128], index: 1, kind: input, shape index: {}]
  %s2 = inlined_call_operand.vmem [shape: f32[128,3], index: 2, kind: output, shape index: {}]
  %s3 = sld [smem:[#allocation0]]
  $region26: #{tpu_custom_call.1} parent=0
    _
  %s5 = ssub.s32 1, %s3
  %s6 = scalar_select 0, %s5, %s3
  $region1: #{tpu_custom_call.1} parent=0
    #allocation2 [shape = 'u8[512]{0}', space=vmem, size = 0x400, scoped, tag = 'input window, operand 0, single buffered']
    #allocation3 [shape = 's32[1]{0}', space=sflag, size = 0x4, scoped, tag = 'scoped memory for tpu_custom_call.1']
    #allocation4 [shape = 'u8[4096]{0}', space=vmem, size = 0x1000, scoped, tag = 'input window, operand 1, single buffered']
    #allocation5 [shape = 's32[1]{0}', space=sflag, size = 0x4, scoped, tag = 'scoped memory for tpu_custom_call.1']
    %7 = vsyncpa [#allocation3], 0
    %8 = vsyncpa [#allocation5], 0
    // Predicated region
    $region2: #{tpu_custom_call.1} parent=1 // pred_check
      _
    $region3: #{tpu_custom_call.1} parent=1 // pred_check_branch
      %10 = sbr.rel (0) target = $region5
    $region4: #{tpu_custom_call.1} parent=1 // pred_region
      %s12 = ssub.s32 16, 16
      %13 = vsyncadd [#allocation3], %s12
      %s15 = sshll.u32 [#allocation2], 4
      %s16 = int_to_ptr.vmem [resolvable:$true] %s15
      %18 = dma.hbm_to_vmem [thread:$0]  %s0, 16, %s16, [#allocation3]
    $region5: #{tpu_custom_call.1} parent=1 // pred_fallthru
      _
    // Predicated region
    $region6: #{tpu_custom_call.1} parent=1 // pred_check
      _
    $region7: #{tpu_custom_call.1} parent=1 // pred_check_branch
      %20 = sbr.rel (0) target = $region9
    $region8: #{tpu_custom_call.1} parent=1 // pred_region
      %s22 = ssub.s32 128, 128
      %23 = vsyncadd [#allocation5], %s22
      %s25 = sshll.u32 [#allocation4], 4
      %s26 = int_to_ptr.vmem [resolvable:$true] %s25
      %28 = dma.hbm_to_vmem [thread:$0]  %s1, 128, %s26, [#allocation5]
    $region9: #{tpu_custom_call.1} parent=1 // pred_fallthru
      _
    // Predicated region
    $region10: #{tpu_custom_call.1} parent=1 // pred_check
      _
    $region11: #{tpu_custom_call.1} parent=1 // pred_check_branch
      %30 = sbr.rel (0) target = $region13
    $region12: #{tpu_custom_call.1} parent=1 // pred_region
      %31 = dma.done [#allocation3], 16
    $region13: #{tpu_custom_call.1} parent=1 // pred_fallthru
      _
    // Predicated region
    $region14: #{tpu_custom_call.1} parent=1 // pred_check
      _
    $region15: #{tpu_custom_call.1} parent=1 // pred_check_branch
      %33 = sbr.rel (0) target = $region17
    $region16: #{tpu_custom_call.1} parent=1 // pred_region
      %34 = dma.done [#allocation5], 128
    $region17: #{tpu_custom_call.1} parent=1 // pred_fallthru
      _
    %v35 = vld [vmem:[#allocation4] sm:$0xff]
    %v36 = vld [vmem:[#allocation2] sm:$0x1]
    %v37 = vlaneseq
    %v38 = vshrl.u32 %v37, 7
    %v39 = vsub.s32 0, %v38
    %v40 = vrot.slane %v36, %v39
    %vm41 = vcmp.lt.s32.totalorder %v40, 0
    %v42 = vadd.s32 %v40, 128
    %v43 = vsel %vm41, %v42, %v40
    %44 = vset.pattern.permute.xlu0 %v43
    %45 = vperm.xlu0 %44, %v35
    %v46 = vpop.permute.xlu0 %45
    %47 = vxpose.xlu0.b32.start [1/16] %v46, 128
    %48 = vxpose.xlu0.b32.cont [2/16] 0.0, 128
    %49 = vxpose.xlu0.b32.cont [3/16] 0.0, 128
    %50 = vxpose.xlu0.b32.cont [4/16] 0.0, 128
    %51 = vxpose.xlu0.b32.cont [5/16] 0.0, 128
    %52 = vxpose.xlu0.b32.cont [6/16] 0.0, 128
    %53 = vxpose.xlu0.b32.cont [7/16] 0.0, 128
    %54 = vxpose.xlu0.b32.cont [8/16] 0.0, 128
    %55 = vxpose.xlu0.b32.cont [9/16] 0.0, 128
    %56 = vxpose.xlu0.b32.cont [10/16] 0.0, 128
    %57 = vxpose.xlu0.b32.cont [11/16] 0.0, 128
    %58 = vxpose.xlu0.b32.cont [12/16] 0.0, 128
    %59 = vxpose.xlu0.b32.cont [13/16] 0.0, 128
    %60 = vxpose.xlu0.b32.cont [14/16] 0.0, 128
    %61 = vxpose.xlu0.b32.cont [15/16] 0.0, 128
    %62 = vxpose.xlu0.b32.end [16/16] 0.0, 128
    %v63 = vpop.trf.xlu0
    %v64 = vpop.trf.xlu0
    %v65 = vpop.trf.xlu0
    %v66 = vpop.trf.xlu0
    %v67 = vpop.trf.xlu0
    %v68 = vpop.trf.xlu0
    %v69 = vpop.trf.xlu0
    %v70 = vpop.trf.xlu0
    %v71 = vpop.trf.xlu0
    %v72 = vpop.trf.xlu0
    %v73 = vpop.trf.xlu0
    %v74 = vpop.trf.xlu0
    %v75 = vpop.trf.xlu0
    %v76 = vpop.trf.xlu0
    %v77 = vpop.trf.xlu0
    %v78 = vpop.trf.xlu0
    %vm79 = vcmask 23552
    %80 = vst.msk [vmem:[%s2] sm:$0xff] %vm79, %v63
    %81 = vst.msk [vmem:[%s2 + $0x8] sm:$0xff] %vm79, %v64
    %82 = vst.msk [vmem:[%s2 + $0x10] sm:$0xff] %vm79, %v65
    %83 = vst.msk [vmem:[%s2 + $0x18] sm:$0xff] %vm79, %v66
    %84 = vst.msk [vmem:[%s2 + $0x20] sm:$0xff] %vm79, %v67
    %85 = vst.msk [vmem:[%s2 + $0x28] sm:$0xff] %vm79, %v68
    %86 = vst.msk [vmem:[%s2 + $0x30] sm:$0xff] %vm79, %v69
    %87 = vst.msk [vmem:[%s2 + $0x38] sm:$0xff] %vm79, %v70
    %88 = vst.msk [vmem:[%s2 + $0x40] sm:$0xff] %vm79, %v71
    %89 = vst.msk [vmem:[%s2 + $0x48] sm:$0xff] %vm79, %v72
    %90 = vst.msk [vmem:[%s2 + $0x50] sm:$0xff] %vm79, %v73
    %91 = vst.msk [vmem:[%s2 + $0x58] sm:$0xff] %vm79, %v74
    %92 = vst.msk [vmem:[%s2 + $0x60] sm:$0xff] %vm79, %v75
    %93 = vst.msk [vmem:[%s2 + $0x68] sm:$0xff] %vm79, %v76
    %94 = vst.msk [vmem:[%s2 + $0x70] sm:$0xff] %vm79, %v77
    %95 = vst.msk [vmem:[%s2 + $0x78] sm:$0xff] %vm79, %v78
    // Predicated region
    $region18: #{tpu_custom_call.1} parent=1 // pred_check
      _
    $region19: #{tpu_custom_call.1} parent=1 // pred_check_branch
      %97 = sbr.rel (0) target = $region21
    $region20: #{tpu_custom_call.1} parent=1 // pred_region
      _
    $region21: #{tpu_custom_call.1} parent=1 // pred_fallthru
      _
    // Predicated region
    $region22: #{tpu_custom_call.1} parent=1 // pred_check
      _
    $region23: #{tpu_custom_call.1} parent=1 // pred_check_branch
      %99 = sbr.rel (0) target = $region25
    $region24: #{tpu_custom_call.1} parent=1 // pred_region
      _
    $region25: #{tpu_custom_call.1} parent=1 // pred_fallthru
      _
    %100 = vsyncpa [#allocation3], 1
    %101 = vsyncpa [#allocation5], 1

// kernel: tpu_custom_call.1
$region0: #{tpu_custom_call.1}
  #allocation0 [shape = 'u32[]', space=smem, size = 0x4, offset = 0x4, fixed_abs, tag = 'smem constant byte address 0x4 - core index']
  #allocation1 [shape = 'u32[144,128]{1,0:T(1,128)}', space=vmem, size = 0x12000, scoped, tag = 'internal scratch']
  %s0 = inlined_call_operand.hbm [shape: s32[1,512], index: 0, kind: input, shape index: {}]
  %s1 = inlined_call_operand.hbm [shape: f32[8,8], index: 1, kind: input, shape index: {}]
  %s2 = inlined_call_operand.vmem [shape: f32[512,3], index: 2, kind: output, shape index: {}]
  %s3 = sld [smem:[#allocation0]]
  $region49: #{tpu_custom_call.1} parent=0
    _
  %s5 = ssub.s32 1, %s3
  %s6 = scalar_select 0, %s5, %s3
  $region1: #{tpu_custom_call.1} parent=0
    #allocation2 [shape = 'u8[1024]{0}', space=vmem, size = 0x400, scoped, tag = 'input window, operand 0']
    #allocation3 [shape = 's32[2]{0}', space=sflag, size = 0x8, scoped, tag = 'scoped memory for tpu_custom_call.1']
    #allocation4 [shape = 'u8[4096]{0}', space=vmem, size = 0x1000, scoped, tag = 'input window, operand 1, single buffered']
    #allocation5 [shape = 's32[1]{0}', space=sflag, size = 0x4, scoped, tag = 'scoped memory for tpu_custom_call.1']
    %7 = vsyncpa [#allocation3], 0
    %s8 = scalar_lea.sflag [#allocation3], 1
    %9 = vsyncpa %s8, 0
    %10 = vsyncpa [#allocation5], 0
    loop: start=0, step=1, limit=6
    $region2: #{tpu_custom_call.1} parent=1 // loop_pre_header
      _
    $region3: #{tpu_custom_call.1} parent=1 // loop_header
      %s12 = sphi 0, %s16
      %p13 = scmp.ge.s32.totalorder %s12, 6
      %s22 = sphi 0, %s24
      %s25 = sphi 0, %s22
      %s26 = sphi 0, %s25
      %s42 = sphi 0, %s26
      %s46 = sphi 0, %s46
      %s48 = sphi 0, %s46
      %s49 = sphi 0, %s48
      %s63 = sphi 0, %s49
      %s69 = sphi 0, %s71
      %s72 = sphi 0, %s69
      %s73 = sphi 0, %s72
      %s89 = sphi 0, %s73
    $region4: #{tpu_custom_call.1} parent=1 // loop_header_branch
      %15 = sbr.rel (%p13) target = $region8
    $region5: #{tpu_custom_call.1} parent=1 // loop_body
      %s17 = ssub.s32 %s12, 1
      %s18 = ssub.s32 %s12, 2
      %s19 = sadd.s32 %s12, 1
      %s20 = ssub.s32 %s12, %s19
      %p21 = scmp.eq.s32.totalorder %s20, 0
      %s23 = sadd.s32 %s22, 1
      %s24 = scalar_select %p21, %s22, %s23
      %p27 = pneg %p21
      %p28 = scmp.eq.s32.totalorder %s12, 3
      %p29 = por %p27, %p28
      %p30 = scmp.ne.s32.totalorder %s22, %s25
      %p31 = scmp.eq.s32.totalorder %s12, 0
      %p32 = por %p30, %p31
      %p33 = scmp.ne.s32.totalorder %s22, %s25
      %p34 = scmp.eq.s32.totalorder %s17, 3
      %p35 = por %p33, %p34
      %p36 = scmp.ne.s32.totalorder %s25, %s26
      %p37 = scmp.eq.s32.totalorder %s17, 0
      %p38 = por %p36, %p37
      %p39 = scmp.ne.s32.totalorder %s25, %s26
      %p40 = scmp.eq.s32.totalorder %s18, 3
      %p41 = por %p39, %p40
      %p43 = scmp.ne.s32.totalorder %s26, %s42
      %p44 = scmp.eq.s32.totalorder %s18, 0
      %p45 = por %p43, %p44
      %s47 = sadd.s32 %s46, 1
      %p50 = scmp.eq.s32.totalorder %s12, 3
      %p51 = scmp.ne.s32.totalorder %s46, %s48
      %p52 = scmp.eq.s32.totalorder %s12, 0
      %p53 = por %p51, %p52
      %p54 = scmp.ne.s32.totalorder %s46, %s48
      %p55 = scmp.eq.s32.totalorder %s17, 3
      %p56 = por %p54, %p55
      %p57 = scmp.ne.s32.totalorder %s48, %s49
      %p58 = scmp.eq.s32.totalorder %s17, 0
      %p59 = por %p57, %p58
      %p60 = scmp.ne.s32.totalorder %s48, %s49
      %p61 = scmp.eq.s32.totalorder %s18, 3
      %p62 = por %p60, %p61
      %p64 = scmp.ne.s32.totalorder %s49, %s63
      %p65 = scmp.eq.s32.totalorder %s18, 0
      %p66 = por %p64, %p65
      %s67 = ssub.s32 %s12, %s19
      %p68 = scmp.eq.s32.totalorder %s67, 0
      %s70 = sadd.s32 %s69, 1
      %s71 = scalar_select %p68, %s69, %s70
      %p74 = pneg %p68
      %p75 = scmp.eq.s32.totalorder %s12, 3
      %p76 = por %p74, %p75
      %p77 = scmp.ne.s32.totalorder %s69, %s72
      %p78 = scmp.eq.s32.totalorder %s12, 0
      %p79 = por %p77, %p78
      %p80 = scmp.ne.s32.totalorder %s69, %s72
      %p81 = scmp.eq.s32.totalorder %s17, 3
      %p82 = por %p80, %p81
      %p83 = scmp.ne.s32.totalorder %s72, %s73
      %p84 = scmp.eq.s32.totalorder %s17, 0
      %p85 = por %p83, %p84
      %p86 = scmp.ne.s32.totalorder %s72, %s73
      %p87 = scmp.eq.s32.totalorder %s18, 3
      %p88 = por %p86, %p87
      %p90 = scmp.ne.s32.totalorder %s73, %s89
      %p91 = scmp.eq.s32.totalorder %s18, 0
      %p92 = por %p90, %p91
      %p93 = scmp.le.s32.totalorder 1, %s12
      %p94 = scmp.lt.s32.totalorder %s12, 5
      %p95 = pnand %p93, %p94
      %p96 = pneg %p95
      // Predicated region
      $region9: #{tpu_custom_call.1} parent=5 // pred_check
        _
      $region10: #{tpu_custom_call.1} parent=5 // pred_check_branch
        %98 = sbr.rel (%p95) target = $region12
      $region11: #{tpu_custom_call.1} parent=5 // pred_region
        %s99 = ssub.s32 %s12, 1
        // Predicated region
        $region13: #{tpu_custom_call.1} parent=11 // pred_check
          %p100 = pneg %p59
        $region14: #{tpu_custom_call.1} parent=11 // pred_check_branch
          %102 = sbr.rel (%p100) target = $region16
        $region15: #{tpu_custom_call.1} parent=11 // pred_region
          %s104 = ssub.s32 128, 128
          %105 = vsyncadd [#allocation5], %s104
          %s107 = sshll.u32 [#allocation4], 4
          %s108 = int_to_ptr.vmem [resolvable:$true] %s107
          %110 = dma.hbm_to_vmem [thread:$0]  %s1, 128, %s108, [#allocation5]
        $region16: #{tpu_custom_call.1} parent=11 // pred_fallthru
          _
      $region12: #{tpu_custom_call.1} parent=5 // pred_fallthru
        _
      %p111 = scmp.lt.s32.totalorder %s12, 4
      // Predicated region
      $region17: #{tpu_custom_call.1} parent=5 // pred_check
        %p112 = pneg %p111
      $region18: #{tpu_custom_call.1} parent=5 // pred_check_branch
        %114 = sbr.rel (%p112) target = $region20
      $region19: #{tpu_custom_call.1} parent=5 // pred_region
        // Predicated region
        $region21: #{tpu_custom_call.1} parent=19 // pred_check
          %p115 = pneg %p32
        $region22: #{tpu_custom_call.1} parent=19 // pred_check_branch
          %117 = sbr.rel (%p115) target = $region24
        $region23: #{tpu_custom_call.1} parent=19 // pred_region
          %s118 = sand.u32 %s22, 1
          %s119 = scalar_lea.sflag [#allocation3], %s118
          %s120 = sand.u32 %s22, 1
          %s121 = scalar_lea.vmem [#allocation2], %s120
          %s123 = ssub.s32 16, 16
          %124 = vsyncadd %s119, %s123
          %s125 = smul.addr %s12, 16
          %s126 = scalar_lea.hbm %s0, %s125
          %s128 = sshll.u32 %s121, 4
          %s129 = int_to_ptr.vmem [resolvable:$true] %s128
          %131 = dma.hbm_to_vmem [thread:$0]  %s126, 16, %s129, %s119
        $region24: #{tpu_custom_call.1} parent=19 // pred_fallthru
          _
      $region20: #{tpu_custom_call.1} parent=5 // pred_fallthru
        _
      %p132 = scmp.le.s32.totalorder 1, %s12
      %p133 = scmp.lt.s32.totalorder %s12, 5
      %p134 = pnand %p132, %p133
      %p135 = pneg %p134
      // Predicated region
      $region25: #{tpu_custom_call.1} parent=5 // pred_check
        _
      $region26: #{tpu_custom_call.1} parent=5 // pred_check_branch
        %137 = sbr.rel (%p134) target = $region28
      $region27: #{tpu_custom_call.1} parent=5 // pred_region
        %s138 = ssub.s32 %s12, 1
        %s139 = sand.u32 %s25, 1
        %s140 = scalar_lea.sflag [#allocation3], %s139
        %s141 = sand.u32 %s25, 1
        %s142 = scalar_lea.vmem [#allocation2], %s141
        // Predicated region
        $region29: #{tpu_custom_call.1} parent=27 // pred_check
          %p143 = pneg %p38
        $region30: #{tpu_custom_call.1} parent=27 // pred_check_branch
          %145 = sbr.rel (%p143) target = $region32
        $region31: #{tpu_custom_call.1} parent=27 // pred_region
          %146 = dma.done %s140, 16
        $region32: #{tpu_custom_call.1} parent=27 // pred_fallthru
          _
        // Predicated region
        $region33: #{tpu_custom_call.1} parent=27 // pred_check
          %p147 = pneg %p59
        $region34: #{tpu_custom_call.1} parent=27 // pred_check_branch
          %149 = sbr.rel (%p147) target = $region36
        $region35: #{tpu_custom_call.1} parent=27 // pred_region
          %150 = dma.done [#allocation5], 128
        $region36: #{tpu_custom_call.1} parent=27 // pred_fallthru
          _
        %s151 = sand.u32 %s25, 1
        %s152 = scalar_lea.sflag [#allocation3], %s151
        %s153 = sand.u32 %s25, 1
        %s154 = scalar_lea.vmem [#allocation2], %s153
        %p155 = pneg %p38
        %p156 = pneg %p35
        %p157 = pneg %p59
        %p158 = pneg %p56
        %p159 = pneg %p85
        %p160 = pneg %p82
        %s161 = smul.u32 16, %s17
        %p162 = scmp.lt.s32.totalorder %s161, 63
        %s163 = scalar_select %p162, %s161, 63
        %s164 = smul.addr %s163, 8
        %s165 = scalar_lea.vmem %s2, %s164
        %s166 = smul.u32 16, %s17
        %p167 = scmp.lt.s32.totalorder %s166, 63
        %s168 = scalar_select %p167, %s166, 63
        %s169 = smul.addr %s168, 8
        %s170 = scalar_lea.vmem %s2, %s169
        %s171 = smul.u32 16, %s17
        %v172 = vlaneseq
        %v173 = vshrl.u32 %v172, 7
        %v174 = vld [vmem:[%s142] sm:$0x1]
        %v175 = vlaneseq
        %v176 = vshrl.u32 %v175, 7
        %v177 = vsub.s32 0, %v176
        %v178 = vrot.slane %v174, %v177
        %vm179 = vcmp.eq.s32.totalorder %v173, %v178
        %v180 = vsel %vm179, 1.0, 0.0
        %v181 = vld [vmem:[#allocation4] sm:$0xff]
        %vm182 = vcmask 64512
        %v184 = vsel %vm182, %v181, 0
        %186 = vmatprep.subr.mxu0 0.0
        %187 = vmatpush1.msra.mxu0 %v180
        %188 = vmatprep.subr.mxu0 0.0
        %189 = vmatpush1.msra.mxu0 0.0
        %190 = vmatprep.subr.mxu0 0.0
        %191 = vmatpush1.msra.mxu0 0.0
        %192 = vmatprep.subr.mxu0 0.0
        %193 = vmatpush1.msra.mxu0 0.0
        %194 = vmatprep.subr.mxu0 0.0
        %195 = vmatpush1.msra.mxu0 0.0
        %196 = vmatprep.subr.mxu0 0.0
        %197 = vmatpush1.msra.mxu0 0.0
        %198 = vmatprep.subr.mxu0 0.0
        %199 = vmatpush1.msra.mxu0 0.0
        %200 = vmatprep.subr.mxu0 0.0
        %201 = vmatpush1.msra.mxu0 0.0
        %202 = vmatprep.subr.mxu0 0.0
        %203 = vmatpush1.msra.mxu0 0.0
        %204 = vmatprep.subr.mxu0 0.0
        %205 = vmatpush1.msra.mxu0 0.0
        %206 = vmatprep.subr.mxu0 0.0
        %207 = vmatpush1.msra.mxu0 0.0
        %208 = vmatprep.subr.mxu0 0.0
        %209 = vmatpush1.msra.mxu0 0.0
        %210 = vmatprep.subr.mxu0 0.0
        %211 = vmatpush1.msra.mxu0 0.0
        %212 = vmatprep.subr.mxu0 0.0
        %213 = vmatpush1.msra.mxu0 0.0
        %214 = vmatprep.subr.mxu0 0.0
        %215 = vmatpush1.msra.mxu0 0.0
        %216 = vmatprep.subr.mxu0 0.0
        %217 = vmatpush1.msra.mxu0 0.0
        %218 = vmatprep.subr.mxu0 0.0
        %219 = vmatpush1.msra.mxu0 0.0
        %220 = vmatprep.subr.mxu0 0.0
        %221 = vmatpush1.msra.mxu0 0.0
        %222 = vmatprep.subr.mxu0 0.0
        %223 = vmatpush1.msra.mxu0 0.0
        %224 = vmatprep.subr.mxu0 0.0
        %225 = vmatpush1.msra.mxu0 0.0
        %226 = vmatprep.subr.mxu0 0.0
        %227 = vmatpush1.msra.mxu0 0.0
        %228 = vmatprep.subr.mxu0 0.0
        %229 = vmatpush1.msra.mxu0 0.0
        %230 = vmatprep.subr.mxu0 0.0
        %231 = vmatpush1.msra.mxu0 0.0
        %232 = vmatprep.subr.mxu0 0.0
        %233 = vmatpush1.msra.mxu0 0.0
        %234 = vmatprep.subr.mxu0 0.0
        %235 = vmatpush1.msra.mxu0 0.0
        %236 = vmatprep.subr.mxu0 0.0
        %237 = vmatpush1.msra.mxu0 0.0
        %238 = vmatprep.subr.mxu0 0.0
        %239 = vmatpush1.msra.mxu0 0.0
        %240 = vmatprep.subr.mxu0 0.0
        %241 = vmatpush1.msra.mxu0 0.0
        %242 = vmatprep.subr.mxu0 0.0
        %243 = vmatpush1.msra.mxu0 0.0
        %244 = vmatprep.subr.mxu0 0.0
        %245 = vmatpush1.msra.mxu0 0.0
        %246 = vmatprep.subr.mxu0 0.0
        %247 = vmatpush1.msra.mxu0 0.0
        %248 = vmatprep.subr.mxu0 0.0
        %249 = vmatpush1.msra.mxu0 0.0
        %250 = vmatprep.mubr.f32.mxu0 0.0
        %v251 = vand.u32 %v184, 4294901760
        %v252 = vsub.f32 %v184, %v251
        %v253 = vand.u32 %v252, 4294901760
        %v254 = vsub.f32 %v252, %v253
        %v255 = vand.u32 %v254, 4294901760
        %256 = vmatmul.mubr.f32.gmra.mrb[0].mxu0 %v255
        %v257 = vpop.f32.mrb[0].mxu0
        %v258 = vadd.f32 0.0, %v257
        %v259 = vpop.f32.mrb[0].mxu0
        %260 = vdwg.mxu0
        %261 = vmatprep.subr.mxu0 0.0
        %v262 = vsub.f32 %v180, %v180
        %v263 = vand.u32 %v262, 4294901760
        %v264 = vsub.f32 %v262, %v263
        %v265 = vand.u32 %v264, 4294901760
        %266 = vmatpush1.msra.mxu0 %v265
        %267 = vmatprep.subr.mxu0 0.0
        %268 = vmatpush1.msra.mxu0 0.0
        %269 = vmatprep.subr.mxu0 0.0
        %270 = vmatpush1.msra.mxu0 0.0
        %271 = vmatprep.subr.mxu0 0.0
        %272 = vmatpush1.msra.mxu0 0.0
        %273 = vmatprep.subr.mxu0 0.0
        %274 = vmatpush1.msra.mxu0 0.0
        %275 = vmatprep.subr.mxu0 0.0
        %276 = vmatpush1.msra.mxu0 0.0
        %277 = vmatprep.subr.mxu0 0.0
        %278 = vmatpush1.msra.mxu0 0.0
        %279 = vmatprep.subr.mxu0 0.0
        %280 = vmatpush1.msra.mxu0 0.0
        %281 = vmatprep.subr.mxu0 0.0
        %282 = vmatpush1.msra.mxu0 0.0
        %283 = vmatprep.subr.mxu0 0.0
        %284 = vmatpush1.msra.mxu0 0.0
        %285 = vmatprep.subr.mxu0 0.0
        %286 = vmatpush1.msra.mxu0 0.0
        %287 = vmatprep.subr.mxu0 0.0
        %288 = vmatpush1.msra.mxu0 0.0
        %289 = vmatprep.subr.mxu0 0.0
        %290 = vmatpush1.msra.mxu0 0.0
        %291 = vmatprep.subr.mxu0 0.0
        %292 = vmatpush1.msra.mxu0 0.0
        %293 = vmatprep.subr.mxu0 0.0
        %294 = vmatpush1.msra.mxu0 0.0
        %295 = vmatprep.subr.mxu0 0.0
        %296 = vmatpush1.msra.mxu0 0.0
        %297 = vmatprep.subr.mxu0 0.0
        %298 = vmatpush1.msra.mxu0 0.0
        %299 = vmatprep.subr.mxu0 0.0
        %300 = vmatpush1.msra.mxu0 0.0
        %301 = vmatprep.subr.mxu0 0.0
        %302 = vmatpush1.msra.mxu0 0.0
        %303 = vmatprep.subr.mxu0 0.0
        %304 = vmatpush1.msra.mxu0 0.0
        %305 = vmatprep.subr.mxu0 0.0
        %306 = vmatpush1.msra.mxu0 0.0
        %307 = vmatprep.subr.mxu0 0.0
        %308 = vmatpush1.msra.mxu0 0.0
        %309 = vmatprep.subr.mxu0 0.0
        %310 = vmatpush1.msra.mxu0 0.0
        %311 = vmatprep.subr.mxu0 0.0
        %312 = vmatpush1.msra.mxu0 0.0
        %313 = vmatprep.subr.mxu0 0.0
        %314 = vmatpush1.msra.mxu0 0.0
        %315 = vmatprep.subr.mxu0 0.0
        %316 = vmatpush1.msra.mxu0 0.0
        %317 = vmatprep.subr.mxu0 0.0
        %318 = vmatpush1.msra.mxu0 0.0
        %319 = vmatprep.subr.mxu0 0.0
        %320 = vmatpush1.msra.mxu0 0.0
        %321 = vmatprep.subr.mxu0 0.0
        %322 = vmatpush1.msra.mxu0 0.0
        %323 = vmatprep.subr.mxu0 0.0
        %324 = vmatpush1.msra.mxu0 0.0
        %325 = vmatprep.subr.mxu0 0.0
        %326 = vmatpush1.msra.mxu0 0.0
        %327 = vmatprep.subr.mxu0 0.0
        %328 = vmatpush1.msra.mxu0 0.0
        %329 = vmatprep.mubr.f32.mxu0 0.0
        %v330 = vand.u32 %v184, 4294901760
        %331 = vmatmul.mubr.f32.gmra.mrb[0].mxu0 %v330
        %v332 = vpop.f32.mrb[0].mxu0
        %v333 = vadd.f32 %v258, %v332
        %v334 = vpop.f32.mrb[0].mxu0
        %335 = vdwg.mxu0
        %336 = vmatprep.subr.mxu0 0.0
        %v337 = vsub.f32 %v180, %v180
        %338 = vmatpush1.msra.mxu0 %v337
        %339 = vmatprep.subr.mxu0 0.0
        %340 = vmatpush1.msra.mxu0 0.0
        %341 = vmatprep.subr.mxu0 0.0
        %342 = vmatpush1.msra.mxu0 0.0
        %343 = vmatprep.subr.mxu0 0.0
        %344 = vmatpush1.msra.mxu0 0.0
        %345 = vmatprep.subr.mxu0 0.0
        %346 = vmatpush1.msra.mxu0 0.0
        %347 = vmatprep.subr.mxu0 0.0
        %348 = vmatpush1.msra.mxu0 0.0
        %349 = vmatprep.subr.mxu0 0.0
        %350 = vmatpush1.msra.mxu0 0.0
        %351 = vmatprep.subr.mxu0 0.0
        %352 = vmatpush1.msra.mxu0 0.0
        %353 = vmatprep.subr.mxu0 0.0
        %354 = vmatpush1.msra.mxu0 0.0
        %355 = vmatprep.subr.mxu0 0.0
        %356 = vmatpush1.msra.mxu0 0.0
        %357 = vmatprep.subr.mxu0 0.0
        %358 = vmatpush1.msra.mxu0 0.0
        %359 = vmatprep.subr.mxu0 0.0
        %360 = vmatpush1.msra.mxu0 0.0
        %361 = vmatprep.subr.mxu0 0.0
        %362 = vmatpush1.msra.mxu0 0.0
        %363 = vmatprep.subr.mxu0 0.0
        %364 = vmatpush1.msra.mxu0 0.0
        %365 = vmatprep.subr.mxu0 0.0
        %366 = vmatpush1.msra.mxu0 0.0
        %367 = vmatprep.subr.mxu0 0.0
        %368 = vmatpush1.msra.mxu0 0.0
        %369 = vmatprep.subr.mxu0 0.0
        %370 = vmatpush1.msra.mxu0 0.0
        %371 = vmatprep.subr.mxu0 0.0
        %372 = vmatpush1.msra.mxu0 0.0
        %373 = vmatprep.subr.mxu0 0.0
        %374 = vmatpush1.msra.mxu0 0.0
        %375 = vmatprep.subr.mxu0 0.0
        %376 = vmatpush1.msra.mxu0 0.0
        %377 = vmatprep.subr.mxu0 0.0
        %378 = vmatpush1.msra.mxu0 0.0
        %379 = vmatprep.subr.mxu0 0.0
        %380 = vmatpush1.msra.mxu0 0.0
        %381 = vmatprep.subr.mxu0 0.0
        %382 = vmatpush1.msra.mxu0 0.0
        %383 = vmatprep.subr.mxu0 0.0
        %384 = vmatpush1.msra.mxu0 0.0
        %385 = vmatprep.subr.mxu0 0.0
        %386 = vmatpush1.msra.mxu0 0.0
        %387 = vmatprep.subr.mxu0 0.0
        %388 = vmatpush1.msra.mxu0 0.0
        %389 = vmatprep.subr.mxu0 0.0
        %390 = vmatpush1.msra.mxu0 0.0
        %391 = vmatprep.subr.mxu0 0.0
        %392 = vmatpush1.msra.mxu0 0.0
        %393 = vmatprep.subr.mxu0 0.0
        %394 = vmatpush1.msra.mxu0 0.0
        %395 = vmatprep.subr.mxu0 0.0
        %396 = vmatpush1.msra.mxu0 0.0
        %397 = vmatprep.subr.mxu0 0.0
        %398 = vmatpush1.msra.mxu0 0.0
        %399 = vmatprep.subr.mxu0 0.0
        %400 = vmatpush1.msra.mxu0 0.0
        %401 = vmatprep.mubr.f32.mxu0 0.0
        %v402 = vand.u32 %v184, 4294901760
        %v403 = vsub.f32 %v184, %v402
        %404 = vmatmul.mubr.f32.gmra.mrb[0].mxu0 %v403
        %v405 = vpop.f32.mrb[0].mxu0
        %v406 = vadd.f32 %v333, %v405
        %v407 = vpop.f32.mrb[0].mxu0
        %408 = vdwg.mxu0
        %409 = vmatprep.subr.mxu0 0.0
        %410 = vmatpush1.msra.mxu0 %v180
        %411 = vmatprep.subr.mxu0 0.0
        %412 = vmatpush1.msra.mxu0 0.0
        %413 = vmatprep.subr.mxu0 0.0
        %414 = vmatpush1.msra.mxu0 0.0
        %415 = vmatprep.subr.mxu0 0.0
        %416 = vmatpush1.msra.mxu0 0.0
        %417 = vmatprep.subr.mxu0 0.0
        %418 = vmatpush1.msra.mxu0 0.0
        %419 = vmatprep.subr.mxu0 0.0
        %420 = vmatpush1.msra.mxu0 0.0
        %421 = vmatprep.subr.mxu0 0.0
        %422 = vmatpush1.msra.mxu0 0.0
        %423 = vmatprep.subr.mxu0 0.0
        %424 = vmatpush1.msra.mxu0 0.0
        %425 = vmatprep.subr.mxu0 0.0
        %426 = vmatpush1.msra.mxu0 0.0
        %427 = vmatprep.subr.mxu0 0.0
        %428 = vmatpush1.msra.mxu0 0.0
        %429 = vmatprep.subr.mxu0 0.0
        %430 = vmatpush1.msra.mxu0 0.0
        %431 = vmatprep.subr.mxu0 0.0
        %432 = vmatpush1.msra.mxu0 0.0
        %433 = vmatprep.subr.mxu0 0.0
        %434 = vmatpush1.msra.mxu0 0.0
        %435 = vmatprep.subr.mxu0 0.0
        %436 = vmatpush1.msra.mxu0 0.0
        %437 = vmatprep.subr.mxu0 0.0
        %438 = vmatpush1.msra.mxu0 0.0
        %439 = vmatprep.subr.mxu0 0.0
        %440 = vmatpush1.msra.mxu0 0.0
        %441 = vmatprep.subr.mxu0 0.0
        %442 = vmatpush1.msra.mxu0 0.0
        %443 = vmatprep.subr.mxu0 0.0
        %444 = vmatpush1.msra.mxu0 0.0
        %445 = vmatprep.subr.mxu0 0.0
        %446 = vmatpush1.msra.mxu0 0.0
        %447 = vmatprep.subr.mxu0 0.0
        %448 = vmatpush1.msra.mxu0 0.0
        %449 = vmatprep.subr.mxu0 0.0
        %450 = vmatpush1.msra.mxu0 0.0
        %451 = vmatprep.subr.mxu0 0.0
        %452 = vmatpush1.msra.mxu0 0.0
        %453 = vmatprep.subr.mxu0 0.0
        %454 = vmatpush1.msra.mxu0 0.0
        %455 = vmatprep.subr.mxu0 0.0
        %456 = vmatpush1.msra.mxu0 0.0
        %457 = vmatprep.subr.mxu0 0.0
        %458 = vmatpush1.msra.mxu0 0.0
        %459 = vmatprep.subr.mxu0 0.0
        %460 = vmatpush1.msra.mxu0 0.0
        %461 = vmatprep.subr.mxu0 0.0
        %462 = vmatpush1.msra.mxu0 0.0
        %463 = vmatprep.subr.mxu0 0.0
        %464 = vmatpush1.msra.mxu0 0.0
        %465 = vmatprep.subr.mxu0 0.0
        %466 = vmatpush1.msra.mxu0 0.0
        %467 = vmatprep.subr.mxu0 0.0
        %468 = vmatpush1.msra.mxu0 0.0
        %469 = vmatprep.subr.mxu0 0.0
        %470 = vmatpush1.msra.mxu0 0.0
        %471 = vmatprep.subr.mxu0 0.0
        %472 = vmatpush1.msra.mxu0 0.0
        %473 = vmatprep.mubr.f32.mxu0 0.0
        %v474 = vand.u32 %v184, 4294901760
        %v475 = vsub.f32 %v184, %v474
        %v476 = vand.u32 %v475, 4294901760
        %477 = vmatmul.mubr.f32.gmra.mrb[0].mxu0 %v476
        %v478 = vpop.f32.mrb[0].mxu0
        %v479 = vadd.f32 %v406, %v478
        %v480 = vpop.f32.mrb[0].mxu0
        %481 = vdwg.mxu0
        %482 = vmatprep.subr.mxu0 0.0
        %v483 = vsub.f32 %v180, %v180
        %v484 = vand.u32 %v483, 4294901760
        %485 = vmatpush1.msra.mxu0 %v484
        %486 = vmatprep.subr.mxu0 0.0
        %487 = vmatpush1.msra.mxu0 0.0
        %488 = vmatprep.subr.mxu0 0.0
        %489 = vmatpush1.msra.mxu0 0.0
        %490 = vmatprep.subr.mxu0 0.0
        %491 = vmatpush1.msra.mxu0 0.0
        %492 = vmatprep.subr.mxu0 0.0
        %493 = vmatpush1.msra.mxu0 0.0
        %494 = vmatprep.subr.mxu0 0.0
        %495 = vmatpush1.msra.mxu0 0.0
        %496 = vmatprep.subr.mxu0 0.0
        %497 = vmatpush1.msra.mxu0 0.0
        %498 = vmatprep.subr.mxu0 0.0
        %499 = vmatpush1.msra.mxu0 0.0
        %500 = vmatprep.subr.mxu0 0.0
        %501 = vmatpush1.msra.mxu0 0.0
        %502 = vmatprep.subr.mxu0 0.0
        %503 = vmatpush1.msra.mxu0 0.0
        %504 = vmatprep.subr.mxu0 0.0
        %505 = vmatpush1.msra.mxu0 0.0
        %506 = vmatprep.subr.mxu0 0.0
        %507 = vmatpush1.msra.mxu0 0.0
        %508 = vmatprep.subr.mxu0 0.0
        %509 = vmatpush1.msra.mxu0 0.0
        %510 = vmatprep.subr.mxu0 0.0
        %511 = vmatpush1.msra.mxu0 0.0
        %512 = vmatprep.subr.mxu0 0.0
        %513 = vmatpush1.msra.mxu0 0.0
        %514 = vmatprep.subr.mxu0 0.0
        %515 = vmatpush1.msra.mxu0 0.0
        %516 = vmatprep.subr.mxu0 0.0
        %517 = vmatpush1.msra.mxu0 0.0
        %518 = vmatprep.subr.mxu0 0.0
        %519 = vmatpush1.msra.mxu0 0.0
        %520 = vmatprep.subr.mxu0 0.0
        %521 = vmatpush1.msra.mxu0 0.0
        %522 = vmatprep.subr.mxu0 0.0
        %523 = vmatpush1.msra.mxu0 0.0
        %524 = vmatprep.subr.mxu0 0.0
        %525 = vmatpush1.msra.mxu0 0.0
        %526 = vmatprep.subr.mxu0 0.0
        %527 = vmatpush1.msra.mxu0 0.0
        %528 = vmatprep.subr.mxu0 0.0
        %529 = vmatpush1.msra.mxu0 0.0
        %530 = vmatprep.subr.mxu0 0.0
        %531 = vmatpush1.msra.mxu0 0.0
        %532 = vmatprep.subr.mxu0 0.0
        %533 = vmatpush1.msra.mxu0 0.0
        %534 = vmatprep.subr.mxu0 0.0
        %535 = vmatpush1.msra.mxu0 0.0
        %536 = vmatprep.subr.mxu0 0.0
        %537 = vmatpush1.msra.mxu0 0.0
        %538 = vmatprep.subr.mxu0 0.0
        %539 = vmatpush1.msra.mxu0 0.0
        %540 = vmatprep.subr.mxu0 0.0
        %541 = vmatpush1.msra.mxu0 0.0
        %542 = vmatprep.subr.mxu0 0.0
        %543 = vmatpush1.msra.mxu0 0.0
        %544 = vmatprep.subr.mxu0 0.0
        %545 = vmatpush1.msra.mxu0 0.0
        %546 = vmatprep.subr.mxu0 0.0
        %547 = vmatpush1.msra.mxu0 0.0
        %548 = vmatprep.mubr.f32.mxu0 0.0
        %v549 = vand.u32 %v184, 4294901760
        %550 = vmatmul.mubr.f32.gmra.mrb[0].mxu0 %v549
        %v551 = vpop.f32.mrb[0].mxu0
        %v552 = vadd.f32 %v479, %v551
        %v553 = vpop.f32.mrb[0].mxu0
        %554 = vdwg.mxu0
        %555 = vmatprep.subr.mxu0 0.0
        %556 = vmatpush1.msra.mxu0 %v180
        %557 = vmatprep.subr.mxu0 0.0
        %558 = vmatpush1.msra.mxu0 0.0
        %559 = vmatprep.subr.mxu0 0.0
        %560 = vmatpush1.msra.mxu0 0.0
        %561 = vmatprep.subr.mxu0 0.0
        %562 = vmatpush1.msra.mxu0 0.0
        %563 = vmatprep.subr.mxu0 0.0
        %564 = vmatpush1.msra.mxu0 0.0
        %565 = vmatprep.subr.mxu0 0.0
        %566 = vmatpush1.msra.mxu0 0.0
        %567 = vmatprep.subr.mxu0 0.0
        %568 = vmatpush1.msra.mxu0 0.0
        %569 = vmatprep.subr.mxu0 0.0
        %570 = vmatpush1.msra.mxu0 0.0
        %571 = vmatprep.subr.mxu0 0.0
        %572 = vmatpush1.msra.mxu0 0.0
        %573 = vmatprep.subr.mxu0 0.0
        %574 = vmatpush1.msra.mxu0 0.0
        %575 = vmatprep.subr.mxu0 0.0
        %576 = vmatpush1.msra.mxu0 0.0
        %577 = vmatprep.subr.mxu0 0.0
        %578 = vmatpush1.msra.mxu0 0.0
        %579 = vmatprep.subr.mxu0 0.0
        %580 = vmatpush1.msra.mxu0 0.0
        %581 = vmatprep.subr.mxu0 0.0
        %582 = vmatpush1.msra.mxu0 0.0
        %583 = vmatprep.subr.mxu0 0.0
        %584 = vmatpush1.msra.mxu0 0.0
        %585 = vmatprep.subr.mxu0 0.0
        %586 = vmatpush1.msra.mxu0 0.0
        %587 = vmatprep.subr.mxu0 0.0
        %588 = vmatpush1.msra.mxu0 0.0
        %589 = vmatprep.subr.mxu0 0.0
        %590 = vmatpush1.msra.mxu0 0.0
        %591 = vmatprep.subr.mxu0 0.0
        %592 = vmatpush1.msra.mxu0 0.0
        %593 = vmatprep.subr.mxu0 0.0
        %594 = vmatpush1.msra.mxu0 0.0
        %595 = vmatprep.subr.mxu0 0.0
        %596 = vmatpush1.msra.mxu0 0.0
        %597 = vmatprep.subr.mxu0 0.0
        %598 = vmatpush1.msra.mxu0 0.0
        %599 = vmatprep.subr.mxu0 0.0
        %600 = vmatpush1.msra.mxu0 0.0
        %601 = vmatprep.subr.mxu0 0.0
        %602 = vmatpush1.msra.mxu0 0.0
        %603 = vmatprep.subr.mxu0 0.0
        %604 = vmatpush1.msra.mxu0 0.0
        %605 = vmatprep.subr.mxu0 0.0
        %606 = vmatpush1.msra.mxu0 0.0
        %607 = vmatprep.subr.mxu0 0.0
        %608 = vmatpush1.msra.mxu0 0.0
        %609 = vmatprep.subr.mxu0 0.0
        %610 = vmatpush1.msra.mxu0 0.0
        %611 = vmatprep.subr.mxu0 0.0
        %612 = vmatpush1.msra.mxu0 0.0
        %613 = vmatprep.subr.mxu0 0.0
        %614 = vmatpush1.msra.mxu0 0.0
        %615 = vmatprep.subr.mxu0 0.0
        %616 = vmatpush1.msra.mxu0 0.0
        %617 = vmatprep.subr.mxu0 0.0
        %618 = vmatpush1.msra.mxu0 0.0
        %619 = vmatprep.mubr.f32.mxu0 0.0
        %v620 = vand.u32 %v184, 4294901760
        %621 = vmatmul.mubr.f32.gmra.mrb[0].mxu0 %v620
        %v622 = vpop.f32.mrb[0].mxu0
        %v623 = vadd.f32 %v552, %v622
        %v624 = vpop.f32.mrb[0].mxu0
        %625 = vdwg.mxu0
        %626 = vxpose.xlu0.b32.start [1/16] %v623, 128
        %627 = vxpose.xlu0.b32.cont [2/16] 0.0, 128
        %628 = vxpose.xlu0.b32.cont [3/16] 0.0, 128
        %629 = vxpose.xlu0.b32.cont [4/16] 0.0, 128
        %630 = vxpose.xlu0.b32.cont [5/16] 0.0, 128
        %631 = vxpose.xlu0.b32.cont [6/16] 0.0, 128
        %632 = vxpose.xlu0.b32.cont [7/16] 0.0, 128
        %633 = vxpose.xlu0.b32.cont [8/16] 0.0, 128
        %634 = vxpose.xlu0.b32.cont [9/16] 0.0, 128
        %635 = vxpose.xlu0.b32.cont [10/16] 0.0, 128
        %636 = vxpose.xlu0.b32.cont [11/16] 0.0, 128
        %637 = vxpose.xlu0.b32.cont [12/16] 0.0, 128
        %638 = vxpose.xlu0.b32.cont [13/16] 0.0, 128
        %639 = vxpose.xlu0.b32.cont [14/16] 0.0, 128
        %640 = vxpose.xlu0.b32.cont [15/16] 0.0, 128
        %641 = vxpose.xlu0.b32.end [16/16] 0.0, 128
        %v642 = vpop.trf.xlu0
        %v643 = vpop.trf.xlu0
        %v644 = vpop.trf.xlu0
        %v645 = vpop.trf.xlu0
        %v646 = vpop.trf.xlu0
        %v647 = vpop.trf.xlu0
        %v648 = vpop.trf.xlu0
        %v649 = vpop.trf.xlu0
        %v650 = vpop.trf.xlu0
        %v651 = vpop.trf.xlu0
        %v652 = vpop.trf.xlu0
        %v653 = vpop.trf.xlu0
        %v654 = vpop.trf.xlu0
        %v655 = vpop.trf.xlu0
        %v656 = vpop.trf.xlu0
        %v657 = vpop.trf.xlu0
        %vm658 = vcmask 23552
        %659 = vst.msk [vmem:[%s170] sm:$0xff] %vm658, %v642
        %660 = vst.msk [vmem:[%s170 + $0x8] sm:$0xff] %vm658, %v643
        %661 = vst.msk [vmem:[%s170 + $0x10] sm:$0xff] %vm658, %v644
        %662 = vst.msk [vmem:[%s170 + $0x18] sm:$0xff] %vm658, %v645
        %663 = vst.msk [vmem:[%s170 + $0x20] sm:$0xff] %vm658, %v646
        %664 = vst.msk [vmem:[%s170 + $0x28] sm:$0xff] %vm658, %v647
        %665 = vst.msk [vmem:[%s170 + $0x30] sm:$0xff] %vm658, %v648
        %666 = vst.msk [vmem:[%s170 + $0x38] sm:$0xff] %vm658, %v649
        %667 = vst.msk [vmem:[%s170 + $0x40] sm:$0xff] %vm658, %v650
        %668 = vst.msk [vmem:[%s170 + $0x48] sm:$0xff] %vm658, %v651
        %669 = vst.msk [vmem:[%s170 + $0x50] sm:$0xff] %vm658, %v652
        %670 = vst.msk [vmem:[%s170 + $0x58] sm:$0xff] %vm658, %v653
        %671 = vst.msk [vmem:[%s170 + $0x60] sm:$0xff] %vm658, %v654
        %672 = vst.msk [vmem:[%s170 + $0x68] sm:$0xff] %vm658, %v655
        %673 = vst.msk [vmem:[%s170 + $0x70] sm:$0xff] %vm658, %v656
        %674 = vst.msk [vmem:[%s170 + $0x78] sm:$0xff] %vm658, %v657
        %s675 = smul.u32 16, %s17
        %p676 = scmp.lt.s32.totalorder %s675, 63
        %s677 = scalar_select %p676, %s675, 63
        %s678 = smul.addr %s677, 8
        %s679 = scalar_lea.vmem %s2, %s678
        // Predicated region
        $region37: #{tpu_custom_call.1} parent=27 // pred_check
          %p680 = pneg %p82
        $region38: #{tpu_custom_call.1} parent=27 // pred_check_branch
          %682 = sbr.rel (%p680) target = $region40
        $region39: #{tpu_custom_call.1} parent=27 // pred_region
          %s683 = smul.u32 16, %s17
        $region40: #{tpu_custom_call.1} parent=27 // pred_fallthru
          _
      $region28: #{tpu_custom_call.1} parent=5 // pred_fallthru
        _
      %p684 = scmp.le.s32.totalorder 2, %s12
      // Predicated region
      $region41: #{tpu_custom_call.1} parent=5 // pred_check
        %p685 = pneg %p684
      $region42: #{tpu_custom_call.1} parent=5 // pred_check_branch
        %687 = sbr.rel (%p685) target = $region44
      $region43: #{tpu_custom_call.1} parent=5 // pred_region
        %s688 = ssub.s32 %s12, 2
        // Predicated region
        $region45: #{tpu_custom_call.1} parent=43 // pred_check
          %p689 = pneg %p88
        $region46: #{tpu_custom_call.1} parent=43 // pred_check_branch
          %691 = sbr.rel (%p689) target = $region48
        $region47: #{tpu_custom_call.1} parent=43 // pred_region
          %s692 = smul.u32 16, %s18
          %p693 = scmp.lt.s32.totalorder %s692, 63
          %s694 = scalar_select %p693, %s692, 63
          %s695 = smul.addr %s694, 8
          %s696 = scalar_lea.vmem %s2, %s695
        $region48: #{tpu_custom_call.1} parent=43 // pred_fallthru
          _
      $region44: #{tpu_custom_call.1} parent=5 // pred_fallthru
        _
    $region6: #{tpu_custom_call.1} parent=1 // loop_footer
      %s16 = sadd.s32 1, %s12
    $region7: #{tpu_custom_call.1} parent=1 // loop_footer_branch
      %11 = sbr.rel target = $region3
    $region8: #{tpu_custom_call.1} parent=1 // loop_exit
      _
    %697 = vsyncpa [#allocation3], 1
    %s698 = scalar_lea.sflag [#allocation3], 1
    %699 = vsyncpa %s698, 1
    %700 = vsyncpa [#allocation5], 1

</llo_original>
